<compile_context>
chip_gen: v7x
topology: tpu7x:2x2x1
jax: 0.10.0
libtpu: 0.0.40
codegen_flags: <defaults>
</compile_context>

<pallas_src>
import functools
import math

import jax
import jax.numpy as jnp
from jax.experimental import pallas as pl
from jax.experimental.pallas import tpu as pltpu


def _round_up(x, m):
    return (x + m - 1) // m * m


def _eca_kernel(w_ref, x_ref, o_ref, *, k_size, inv_npix):
    """ECA forward for one batch element.

    w_ref : (k_size,) f32 in SMEM    -- Conv1d(1,1,k) taps (no bias)
    x_ref : (1, Cp, Pp) f32 in VMEM  -- channels on sublanes, pixels on lanes
    o_ref : (1, Cp, Pp) f32 in VMEM
    Cp / Pp are channel / pixel counts padded to multiples of (8, 128); the
    padded rows/lanes are zero and are sliced off by the wrapper.
    """
    x = x_ref[0]                                     # (Cp, Pp)
    Cp = x.shape[0]

    # Banded matrix equivalent to the k-tap "same" cross-correlation over
    # channels: band[i, j] = w[j - i + pad] for |j - i| <= pad, else 0.
    row = jax.lax.broadcasted_iota(jnp.int32, (Cp, Cp), 0)
    col = jax.lax.broadcasted_iota(jnp.int32, (Cp, Cp), 1)
    d = col - row
    pad = (k_size - 1) // 2
    band = jnp.zeros((Cp, Cp), jnp.float32)
    for k in range(k_size):                          # k_size is tiny & static
        band = band + jnp.where(d == (k - pad), w_ref[k], 0.0)

    # conv1d(avg_pool(x)): MXU contraction over channels, then lane reduction.
    # Zero-padded pixels/channels add 0 to the sums; inv_npix uses the true H*W.
    mixed = jnp.dot(band, x, preferred_element_type=jnp.float32)   # (Cp, Pp)
    logit = jnp.sum(mixed, axis=1, keepdims=True) * inv_npix       # (Cp, 1)
    gate = 1.0 / (1.0 + jnp.exp(-logit))                           # sigmoid (EUP)
    o_ref[0] = x * gate                                            # lane-dense store


def eca_block(x_nchw, conv_w):
    """ECABlock forward.  x: (N, C, H, W); conv_w: Conv1d weight (1, 1, k) or (k,)."""
    N, C, H, W = x_nchw.shape
    npix = H * W
    w = jnp.asarray(conv_w, jnp.float32).reshape(-1)
    k_size = int(w.shape[0])

    # Pad channels to a sublane multiple and pixels to a lane multiple so every
    # block and matmul operand is hardware-tile aligned.  Zero padding is exact
    # here: padded pixels add nothing to the pooling sum, and padded channels
    # reproduce the conv's own zero padding / are sliced off below.
    Cp = _round_up(C, 8)
    Pp = _round_up(npix, 128)
    x3 = x_nchw.reshape(N, C, npix).astype(jnp.float32)
    x3 = jnp.pad(x3, ((0, 0), (0, Cp - C), (0, Pp - npix)))

    kernel = functools.partial(_eca_kernel, k_size=k_size, inv_npix=1.0 / npix)
    out = pl.pallas_call(
        kernel,
        out_shape=jax.ShapeDtypeStruct((N, Cp, Pp), jnp.float32),
        grid=(N,),
        in_specs=[
            pl.BlockSpec(memory_space=pltpu.MemorySpace.SMEM),   # conv taps (scalars)
            pl.BlockSpec((1, Cp, Pp), lambda n: (n, 0, 0)),      # one batch element
        ],
        out_specs=pl.BlockSpec((1, Cp, Pp), lambda n: (n, 0, 0)),
        compiler_params=pltpu.CompilerParams(
            dimension_semantics=("parallel",)),
    )(w, x3)

    out = out[:, :C, :npix].reshape(N, C, H, W)
    return out.astype(x_nchw.dtype)


def eca_block_reference(x_nchw, conv_w):
    """Pure-JAX reference matching torch ECABlock.forward semantics."""
    N, C, H, W = x_nchw.shape
    w = jnp.asarray(conv_w, jnp.float32).reshape(-1)
    k = int(w.shape[0])
    pad = (k - 1) // 2
    x = x_nchw.astype(jnp.float32)
    m = jnp.mean(x, axis=(2, 3))                              # (N, C)  avg_pool
    mp = jnp.pad(m, ((0, 0), (pad, pad)))                     # zero-padded channels
    logit = sum(w[i] * mp[:, i:i + C] for i in range(k))      # conv1d, no bias
    gate = 1.0 / (1.0 + jnp.exp(-logit))                      # sigmoid
    out = x * gate[:, :, None, None]
    return out.astype(x_nchw.dtype)


if __name__ == "__main__":
    key = jax.random.PRNGKey(0)
    kx, kw = jax.random.split(key)
    N, C, H, W = 2, 4, 16, 16
    x = jax.random.normal(kx, (N, C, H, W), jnp.float32)
    # PyTorch Conv1d(1, 1, 3, bias=False) default init: U(-b, b), b = 1/sqrt(in_ch*k)
    bound = 1.0 / math.sqrt(1 * 3)
    conv_w = jax.random.uniform(kw, (1, 1, 3), jnp.float32, -bound, bound)

    out = eca_block(x, conv_w)
    out = jax.block_until_ready(out)

    ref = eca_block_reference(x, conv_w)
    assert out.shape == (N, C, H, W), out.shape
    max_err = float(jnp.max(jnp.abs(out - ref)))
    assert max_err < 2e-3, f"mismatch vs reference: {max_err}"

    print("KERNEL_OK")
</pallas_src>

<mosaic_0001>
module attributes {stable_mosaic.version = 11 : i64} {
  func.func @_eca_kernel(%arg0: i32, %arg1: memref<3xf32, #tpu.memory_space<smem>>, %arg2: memref<1x8x256xf32, #tpu.memory_space<vmem>>, %arg3: memref<1x8x256xf32, #tpu.memory_space<vmem>>) attributes {dimension_semantics = [#tpu.dimension_semantics<parallel>], iteration_bounds = array<i64: 2>, scalar_prefetch = 0 : i64, scratch_operands = 0 : i64, tpu.core_type = #tpu.core_type<tc>, window_params = [{transform_indices = @transform_0, window_bounds = array<i64: 3>}, {transform_indices = @transform_1, window_bounds = array<i64: 1, 8, 256>}, {transform_indices = @transform_2, window_bounds = array<i64: 1, 8, 256>}]} {
    %c0 = arith.constant 0 : index
    %c0_0 = arith.constant 0 : index
    %c0_1 = arith.constant 0 : index
    %0 = vector.load %arg2[%c0, %c0_0, %c0_1] : memref<1x8x256xf32, #tpu.memory_space<vmem>>, vector<1x8x256xf32>
    %1 = vector.shape_cast %0 : vector<1x8x256xf32> to vector<8x256xf32>
    %2 = tpu.iota {dimensions = array<i32: 0>} : vector<8x8xi32>
    %3 = tpu.iota {dimensions = array<i32: 1>} : vector<8x8xi32>
    %4 = arith.subi %3, %2 : vector<8x8xi32>
    %cst = arith.constant 0.000000e+00 : f32
    %5 = vector.broadcast %cst : f32 to vector<8x8xf32>
    %c-1_i32 = arith.constant -1 : i32
    %6 = vector.broadcast %c-1_i32 : i32 to vector<8x8xi32>
    %7 = arith.cmpi eq, %4, %6 : vector<8x8xi32>
    %c0_2 = arith.constant 0 : index
    %8 = memref.load %arg1[%c0_2] : memref<3xf32, #tpu.memory_space<smem>>
    %cst_3 = arith.constant 0.000000e+00 : f32
    %9 = vector.broadcast %8 : f32 to vector<8x8xf32>
    %10 = vector.broadcast %cst_3 : f32 to vector<8x8xf32>
    %11 = arith.select %7, %9, %10 : vector<8x8xi1>, vector<8x8xf32>
    %12 = arith.addf %5, %11 : vector<8x8xf32>
    %c0_i32 = arith.constant 0 : i32
    %13 = vector.broadcast %c0_i32 : i32 to vector<8x8xi32>
    %14 = arith.cmpi eq, %4, %13 : vector<8x8xi32>
    %c1 = arith.constant 1 : index
    %15 = memref.load %arg1[%c1] : memref<3xf32, #tpu.memory_space<smem>>
    %cst_4 = arith.constant 0.000000e+00 : f32
    %16 = vector.broadcast %15 : f32 to vector<8x8xf32>
    %17 = vector.broadcast %cst_4 : f32 to vector<8x8xf32>
    %18 = arith.select %14, %16, %17 : vector<8x8xi1>, vector<8x8xf32>
    %19 = arith.addf %12, %18 : vector<8x8xf32>
    %c1_i32 = arith.constant 1 : i32
    %20 = vector.broadcast %c1_i32 : i32 to vector<8x8xi32>
    %21 = arith.cmpi eq, %4, %20 : vector<8x8xi32>
    %c2 = arith.constant 2 : index
    %22 = memref.load %arg1[%c2] : memref<3xf32, #tpu.memory_space<smem>>
    %cst_5 = arith.constant 0.000000e+00 : f32
    %23 = vector.broadcast %22 : f32 to vector<8x8xf32>
    %24 = vector.broadcast %cst_5 : f32 to vector<8x8xf32>
    %25 = arith.select %21, %23, %24 : vector<8x8xi1>, vector<8x8xf32>
    %26 = arith.addf %19, %25 : vector<8x8xf32>
    %cst_6 = arith.constant dense<0.000000e+00> : vector<8x256xf32>
    %27 = tpu.matmul %26, %1, %cst_6 {dimension_numbers = #tpu.dot_dimension_numbers<[1], [0], [0], [1], [0, 0, 1, 1], [], []>} : vector<8x8xf32>, vector<8x256xf32>, vector<8x256xf32> -> vector<8x256xf32>
    %cst_7 = arith.constant dense<0.000000e+00> : vector<8xf32>
    %28 = vector.multi_reduction <add>, %27, %cst_7 [1] : vector<8x256xf32> to vector<8xf32>
    %29 = vector.shape_cast %28 : vector<8xf32> to vector<8x1xf32>
    %cst_8 = arith.constant 3.906250e-03 : f32
    %30 = vector.broadcast %cst_8 : f32 to vector<8x1xf32>
    %31 = arith.mulf %29, %30 : vector<8x1xf32>
    %cst_9 = arith.constant 0.000000e+00 : f32
    %32 = vector.broadcast %cst_9 : f32 to vector<8x1xf32>
    %33 = arith.subf %32, %31 : vector<8x1xf32>
    %34 = math.exp %33 : vector<8x1xf32>
    %cst_10 = arith.constant 1.000000e+00 : f32
    %35 = vector.broadcast %cst_10 : f32 to vector<8x1xf32>
    %36 = arith.addf %35, %34 : vector<8x1xf32>
    %cst_11 = arith.constant 1.000000e+00 : f32
    %37 = vector.broadcast %cst_11 : f32 to vector<8x1xf32>
    %38 = arith.divf %37, %36 : vector<8x1xf32>
    %39 = vector.broadcast %38 : vector<8x1xf32> to vector<8x256xf32>
    %40 = arith.mulf %1, %39 : vector<8x256xf32>
    %c0_12 = arith.constant 0 : index
    %c0_13 = arith.constant 0 : index
    %c0_14 = arith.constant 0 : index
    %41 = vector.load %arg3[%c0_12, %c0_13, %c0_14] : memref<1x8x256xf32, #tpu.memory_space<vmem>>, vector<1x8x256xf32>
    %42 = vector.shape_cast %41 : vector<1x8x256xf32> to vector<8x256xf32>
    %43 = vector.shape_cast %40 : vector<8x256xf32> to vector<1x8x256xf32>
    tpu.vector_store %arg3[%c0_12, %c0_13, %c0_14], %43 {strides = array<i32>} : memref<1x8x256xf32, #tpu.memory_space<vmem>>, vector<1x8x256xf32>,
    return
  }
  func.func @transform_0(%arg0: i32) -> i32 {
    %c0_i32 = arith.constant 0 : i32
    %c0_i32_0 = arith.constant 0 : i32
    return %c0_i32 : i32
  }
  func.func @transform_1(%arg0: i32) -> (i32, i32, i32) {
    %c0_i32 = arith.constant 0 : i32
    %c0_i32_0 = arith.constant 0 : i32
    %c0_i32_1 = arith.constant 0 : i32
    return %arg0, %c0_i32, %c0_i32_0 : i32, i32, i32
  }
  func.func @transform_2(%arg0: i32) -> (i32, i32, i32) {
    %c0_i32 = arith.constant 0 : i32
    %c0_i32_0 = arith.constant 0 : i32
    %c0_i32_1 = arith.constant 0 : i32
    return %arg0, %c0_i32, %c0_i32_0 : i32, i32, i32
  }
}

</mosaic_0001>

<llo_original>
// kernel: tpu_custom_call.1
$region0: #{tpu_custom_call.1}
  #allocation0 [shape = 'u32[]', space=smem, size = 0x4, offset = 0x4, fixed_abs, tag = 'smem constant byte address 0x4 - core index']
  #allocation1 [shape = 'u32[144,128]{1,0:T(1,128)}', space=vmem, size = 0x12000, scoped, tag = 'internal scratch']
  %s0 = inlined_call_operand.hbm [shape: f32[3], index: 0, kind: input, shape index: {}]
  %s1 = inlined_call_operand.hbm [shape: f32[2,8,256], index: 1, kind: input, shape index: {}]
  %s2 = inlined_call_operand.hbm [shape: f32[2,8,256], index: 2, kind: output, shape index: {}]
  %s3 = sld [smem:[#allocation0]]
  $region49: #{tpu_custom_call.1} parent=0
    _
  %s5 = ssub.s32 1, %s3
  %s6 = scalar_select 0, %s5, %s3
  $region1: #{tpu_custom_call.1} parent=0
    #allocation2 [shape = 'u8[512]{0}', space=smem, size = 0x200, scoped, tag = 'input window, operand 0, single buffered']
    #allocation3 [shape = 's32[2]{0}', space=sflag, size = 0x8, scoped, tag = 'scoped memory for tpu_custom_call.1']
    #allocation4 [shape = 's32[2]{0}', space=sflag, size = 0x8, scoped, tag = 'scoped memory for tpu_custom_call.1']
    #allocation5 [shape = 's32[2]{0}', space=sflag, size = 0x8, scoped, tag = 'scoped memory for tpu_custom_call.1']
    #allocation6 [shape = 'u8[16384]{0}', space=vmem, size = 0x4000, scoped, tag = 'input window, operand 1']
    #allocation7 [shape = 'u8[16384]{0}', space=vmem, size = 0x4000, scoped, tag = 'output window, operand 0']
    %7 = vsyncpa [#allocation5], 0
    %8 = vsyncpa [#allocation3], 0
    %s9 = scalar_lea.sflag [#allocation3], 1
    %10 = vsyncpa %s9, 0
    %11 = vsyncpa [#allocation4], 0
    %s12 = scalar_lea.sflag [#allocation4], 1
    %13 = vsyncpa %s12, 0
    loop: start=0, step=1, limit=4
    $region2: #{tpu_custom_call.1} parent=1 // loop_pre_header
      _
    $region3: #{tpu_custom_call.1} parent=1 // loop_header
      %s15 = sphi 0, %s19
      %p16 = scmp.ge.s32.totalorder %s15, 4
      %s23 = sphi 0, %s23
      %s25 = sphi 0, %s23
      %s26 = sphi 0, %s25
      %s40 = sphi 0, %s26
      %s46 = sphi 0, %s48
      %s49 = sphi 0, %s46
      %s50 = sphi 0, %s49
      %s66 = sphi 0, %s50
      %s72 = sphi 0, %s74
      %s75 = sphi 0, %s72
      %s76 = sphi 0, %s75
      %s92 = sphi 0, %s76
    $region4: #{tpu_custom_call.1} parent=1 // loop_header_branch
      %18 = sbr.rel (%p16) target = $region8
    $region5: #{tpu_custom_call.1} parent=1 // loop_body
      %s20 = ssub.s32 %s15, 1
      %s21 = ssub.s32 %s15, 2
      %s22 = sadd.s32 %s15, 1
      %s24 = sadd.s32 %s23, 1
      %p27 = scmp.eq.s32.totalorder %s15, 1
      %p28 = scmp.ne.s32.totalorder %s23, %s25
      %p29 = scmp.eq.s32.totalorder %s15, 0
      %p30 = por %p28, %p29
      %p31 = scmp.ne.s32.totalorder %s23, %s25
      %p32 = scmp.eq.s32.totalorder %s20, 1
      %p33 = por %p31, %p32
      %p34 = scmp.ne.s32.totalorder %s25, %s26
      %p35 = scmp.eq.s32.totalorder %s20, 0
      %p36 = por %p34, %p35
      %p37 = scmp.ne.s32.totalorder %s25, %s26
      %p38 = scmp.eq.s32.totalorder %s21, 1
      %p39 = por %p37, %p38
      %p41 = scmp.ne.s32.totalorder %s26, %s40
      %p42 = scmp.eq.s32.totalorder %s21, 0
      %p43 = por %p41, %p42
      %s44 = ssub.s32 %s15, %s22
      %p45 = scmp.eq.s32.totalorder %s44, 0
      %s47 = sadd.s32 %s46, 1
      %s48 = scalar_select %p45, %s46, %s47
      %p51 = pneg %p45
      %p52 = scmp.eq.s32.totalorder %s15, 1
      %p53 = por %p51, %p52
      %p54 = scmp.ne.s32.totalorder %s46, %s49
      %p55 = scmp.eq.s32.totalorder %s15, 0
      %p56 = por %p54, %p55
      %p57 = scmp.ne.s32.totalorder %s46, %s49
      %p58 = scmp.eq.s32.totalorder %s20, 1
      %p59 = por %p57, %p58
      %p60 = scmp.ne.s32.totalorder %s49, %s50
      %p61 = scmp.eq.s32.totalorder %s20, 0
      %p62 = por %p60, %p61
      %p63 = scmp.ne.s32.totalorder %s49, %s50
      %p64 = scmp.eq.s32.totalorder %s21, 1
      %p65 = por %p63, %p64
      %p67 = scmp.ne.s32.totalorder %s50, %s66
      %p68 = scmp.eq.s32.totalorder %s21, 0
      %p69 = por %p67, %p68
      %s70 = ssub.s32 %s15, %s22
      %p71 = scmp.eq.s32.totalorder %s70, 0
      %s73 = sadd.s32 %s72, 1
      %s74 = scalar_select %p71, %s72, %s73
      %p77 = pneg %p71
      %p78 = scmp.eq.s32.totalorder %s15, 1
      %p79 = por %p77, %p78
      %p80 = scmp.ne.s32.totalorder %s72, %s75
      %p81 = scmp.eq.s32.totalorder %s15, 0
      %p82 = por %p80, %p81
      %p83 = scmp.ne.s32.totalorder %s72, %s75
      %p84 = scmp.eq.s32.totalorder %s20, 1
      %p85 = por %p83, %p84
      %p86 = scmp.ne.s32.totalorder %s75, %s76
      %p87 = scmp.eq.s32.totalorder %s20, 0
      %p88 = por %p86, %p87
      %p89 = scmp.ne.s32.totalorder %s75, %s76
      %p90 = scmp.eq.s32.totalorder %s21, 1
      %p91 = por %p89, %p90
      %p93 = scmp.ne.s32.totalorder %s76, %s92
      %p94 = scmp.eq.s32.totalorder %s21, 0
      %p95 = por %p93, %p94
      %p96 = scmp.le.s32.totalorder 1, %s15
      %p97 = scmp.lt.s32.totalorder %s15, 3
      %p98 = pnand %p96, %p97
      %p99 = pneg %p98
      // Predicated region
      $region9: #{tpu_custom_call.1} parent=5 // pred_check
        _
      $region10: #{tpu_custom_call.1} parent=5 // pred_check_branch
        %101 = sbr.rel (%p98) target = $region12
      $region11: #{tpu_custom_call.1} parent=5 // pred_region
        %s102 = ssub.s32 %s15, 1
        // Predicated region
        $region13: #{tpu_custom_call.1} parent=11 // pred_check
          %p103 = pneg %p36
        $region14: #{tpu_custom_call.1} parent=11 // pred_check_branch
          %105 = sbr.rel (%p103) target = $region16
        $region15: #{tpu_custom_call.1} parent=11 // pred_region
          %s107 = ssub.s32 16, 16
          %108 = vsyncadd [#allocation5], %s107
          %111 = dma.hbm_to_smem %s0, 16, [#allocation2], [#allocation5]
        $region16: #{tpu_custom_call.1} parent=11 // pred_fallthru
          _
      $region12: #{tpu_custom_call.1} parent=5 // pred_fallthru
        _
      %p112 = scmp.lt.s32.totalorder %s15, 2
      // Predicated region
      $region17: #{tpu_custom_call.1} parent=5 // pred_check
        %p113 = pneg %p112
      $region18: #{tpu_custom_call.1} parent=5 // pred_check_branch
        %115 = sbr.rel (%p113) target = $region20
      $region19: #{tpu_custom_call.1} parent=5 // pred_region
        // Predicated region
        $region21: #{tpu_custom_call.1} parent=19 // pred_check
          %p116 = pneg %p56
        $region22: #{tpu_custom_call.1} parent=19 // pred_check_branch
          %118 = sbr.rel (%p116) target = $region24
        $region23: #{tpu_custom_call.1} parent=19 // pred_region
          %s119 = sand.u32 %s46, 1
          %s120 = scalar_lea.sflag [#allocation3], %s119
          %s121 = sand.u32 %s46, 1
          %s122 = smul.addr %s121, 16
          %s123 = scalar_lea.vmem [#allocation6], %s122
          %s125 = ssub.s32 256, 256
          %126 = vsyncadd %s120, %s125
          %s127 = smul.addr %s15, 2
          %s128 = smul.addr %s127, 128
          %s129 = scalar_lea.hbm %s1, %s128
          %s131 = sshll.u32 %s123, 4
          %s132 = int_to_ptr.vmem [resolvable:$true] %s131
          %134 = dma.hbm_to_vmem [thread:$0]  %s129, 256, %s132, %s120
        $region24: #{tpu_custom_call.1} parent=19 // pred_fallthru
          _
      $region20: #{tpu_custom_call.1} parent=5 // pred_fallthru
        _
      %p135 = scmp.le.s32.totalorder 1, %s15
      %p136 = scmp.lt.s32.totalorder %s15, 3
      %p137 = pnand %p135, %p136
      %p138 = pneg %p137
      // Predicated region
      $region25: #{tpu_custom_call.1} parent=5 // pred_check
        _
      $region26: #{tpu_custom_call.1} parent=5 // pred_check_branch
        %140 = sbr.rel (%p137) target = $region28
      $region27: #{tpu_custom_call.1} parent=5 // pred_region
        %s141 = ssub.s32 %s15, 1
        // Predicated region
        $region29: #{tpu_custom_call.1} parent=27 // pred_check
          %p142 = pneg %p36
        $region30: #{tpu_custom_call.1} parent=27 // pred_check_branch
          %144 = sbr.rel (%p142) target = $region32
        $region31: #{tpu_custom_call.1} parent=27 // pred_region
          %145 = dma.done [#allocation5], 16
        $region32: #{tpu_custom_call.1} parent=27 // pred_fallthru
          _
        %s146 = sand.u32 %s49, 1
        %s147 = scalar_lea.sflag [#allocation3], %s146
        %s148 = sand.u32 %s49, 1
        %s149 = smul.addr %s148, 16
        %s150 = scalar_lea.vmem [#allocation6], %s149
        // Predicated region
        $region33: #{tpu_custom_call.1} parent=27 // pred_check
          %p151 = pneg %p62
        $region34: #{tpu_custom_call.1} parent=27 // pred_check_branch
          %153 = sbr.rel (%p151) target = $region36
        $region35: #{tpu_custom_call.1} parent=27 // pred_region
          %154 = dma.done %s147, 256
        $region36: #{tpu_custom_call.1} parent=27 // pred_fallthru
          _
        %155 = sfence
        %p156 = pneg %p36
        %p157 = pneg %p33
        %s158 = sand.u32 %s49, 1
        %s159 = scalar_lea.sflag [#allocation3], %s158
        %s160 = sand.u32 %s49, 1
        %s161 = smul.addr %s160, 16
        %s162 = scalar_lea.vmem [#allocation6], %s161
        %p163 = pneg %p62
        %p164 = pneg %p59
        %p165 = pneg %p88
        %p166 = pneg %p85
        %s167 = sand.u32 %s75, 1
        %s168 = scalar_lea.sflag [#allocation4], %s167
        %s169 = sand.u32 %s75, 1
        %s170 = smul.addr %s169, 16
        %s171 = scalar_lea.vmem [#allocation7], %s170
        %v172 = vld [vmem:[%s150] sm:$0xff]
        %v173 = vld [vmem:[%s150 + $0x8] sm:$0xff]
        %v174 = vlaneseq
        %v175 = vshrl.u32 %v174, 7
        %v176 = vlaneseq
        %v177 = vand.u32 %v176, 127
        %v178 = vsub.s32 %v177, %v175
        %vm179 = vcmp.eq.s32.totalorder %v178, 4294967295
        %s180 = sld [smem:[#allocation2]]
        %v181 = vstv %s180
        %v182 = vsel %vm179, %v181, 0.0
        %v183 = vadd.f32 %v182, 0.0
        %vm184 = vcmp.eq.s32.totalorder %v178, 0
        %s185 = sld [smem:[#allocation2 + $0x1]]
        %v186 = vstv %s185
        %v187 = vsel %vm184, %v186, 0.0
        %v188 = vadd.f32 %v183, %v187
        %vm189 = vcmp.eq.s32.totalorder %v178, 1
        %s190 = sld [smem:[#allocation2 + $0x2]]
        %v191 = vstv %s190
        %v192 = vsel %vm189, %v191, 0.0
        %v193 = vadd.f32 %v188, %v192
        %vm194 = vcmask 64512
        %v196 = vsel %vm194, %v193, 0
        %198 = vmatprep.subr.mxu0 %v173
        %199 = vmatpush1.msra.mxu0 %v172
        %200 = vmatprep.subr.mxu0 0.0
        %201 = vmatpush1.msra.mxu0 0.0
        %202 = vmatprep.subr.mxu0 0.0
        %203 = vmatpush1.msra.mxu0 0.0
        %204 = vmatprep.subr.mxu0 0.0
        %205 = vmatpush1.msra.mxu0 0.0
        %206 = vmatprep.subr.mxu0 0.0
        %207 = vmatpush1.msra.mxu0 0.0
        %208 = vmatprep.subr.mxu0 0.0
        %209 = vmatpush1.msra.mxu0 0.0
        %210 = vmatprep.subr.mxu0 0.0
        %211 = vmatpush1.msra.mxu0 0.0
        %212 = vmatprep.subr.mxu0 0.0
        %213 = vmatpush1.msra.mxu0 0.0
        %214 = vmatprep.subr.mxu0 0.0
        %215 = vmatpush1.msra.mxu0 0.0
        %216 = vmatprep.subr.mxu0 0.0
        %217 = vmatpush1.msra.mxu0 0.0
        %218 = vmatprep.subr.mxu0 0.0
        %219 = vmatpush1.msra.mxu0 0.0
        %220 = vmatprep.subr.mxu0 0.0
        %221 = vmatpush1.msra.mxu0 0.0
        %222 = vmatprep.subr.mxu0 0.0
        %223 = vmatpush1.msra.mxu0 0.0
        %224 = vmatprep.subr.mxu0 0.0
        %225 = vmatpush1.msra.mxu0 0.0
        %226 = vmatprep.subr.mxu0 0.0
        %227 = vmatpush1.msra.mxu0 0.0
        %228 = vmatprep.subr.mxu0 0.0
        %229 = vmatpush1.msra.mxu0 0.0
        %230 = vmatprep.subr.mxu0 0.0
        %231 = vmatpush1.msra.mxu0 0.0
        %232 = vmatprep.subr.mxu0 0.0
        %233 = vmatpush1.msra.mxu0 0.0
        %234 = vmatprep.subr.mxu0 0.0
        %235 = vmatpush1.msra.mxu0 0.0
        %236 = vmatprep.subr.mxu0 0.0
        %237 = vmatpush1.msra.mxu0 0.0
        %238 = vmatprep.subr.mxu0 0.0
        %239 = vmatpush1.msra.mxu0 0.0
        %240 = vmatprep.subr.mxu0 0.0
        %241 = vmatpush1.msra.mxu0 0.0
        %242 = vmatprep.subr.mxu0 0.0
        %243 = vmatpush1.msra.mxu0 0.0
        %244 = vmatprep.subr.mxu0 0.0
        %245 = vmatpush1.msra.mxu0 0.0
        %246 = vmatprep.subr.mxu0 0.0
        %247 = vmatpush1.msra.mxu0 0.0
        %248 = vmatprep.subr.mxu0 0.0
        %249 = vmatpush1.msra.mxu0 0.0
        %250 = vmatprep.subr.mxu0 0.0
        %251 = vmatpush1.msra.mxu0 0.0
        %252 = vmatprep.subr.mxu0 0.0
        %253 = vmatpush1.msra.mxu0 0.0
        %254 = vmatprep.subr.mxu0 0.0
        %255 = vmatpush1.msra.mxu0 0.0
        %256 = vmatprep.subr.mxu0 0.0
        %257 = vmatpush1.msra.mxu0 0.0
        %258 = vmatprep.subr.mxu0 0.0
        %259 = vmatpush1.msra.mxu0 0.0
        %260 = vmatprep.subr.mxu0 0.0
        %261 = vmatpush1.msra.mxu0 0.0
        %262 = vmatprep.mubr.f32.mxu0 0.0
        %263 = vmatmul.mubr.f32.gmra.mrb[0].mxu0 %v196
        %v264 = vpop.f32.mrb[0].mxu0
        %v265 = vadd.f32 0.0, %v264
        %v266 = vpop.f32.mrb[0].mxu0
        %v267 = vadd.f32 0.0, %v266
        %268 = vdwg.mxu0
        %v269 = vadd.f32 %v265, %v267
        %270 = vadd.xlane.f32.xlu0 %v269
        %v271 = vpop.xlane.xlu0 %270
        %v272 = vmul.f32 %v271, 0.00390625
        %v273 = vsub.f32 0.0, %v272
        %v274 = vmul.f32 %v273, 1.442695
        %v275 = vpow.pop %v274
        %v276 = vadd.f32 %v275, 1.0
        %v277 = vrcp.pop %v276
        %v278 = vmul.f32 1.0, %v277
        %v279 = vmul.f32 %v172, %v278
        %v280 = vmul.f32 %v173, %v278
        %281 = vst [vmem:[%s171] sm:$0xff] %v279
        %282 = vst [vmem:[%s171 + $0x8] sm:$0xff] %v280
        %s283 = sand.u32 %s75, 1
        %s284 = scalar_lea.sflag [#allocation4], %s283
        %s285 = sand.u32 %s75, 1
        %s286 = smul.addr %s285, 16
        %s287 = scalar_lea.vmem [#allocation7], %s286
        // Predicated region
        $region37: #{tpu_custom_call.1} parent=27 // pred_check
          %p288 = pneg %p85
        $region38: #{tpu_custom_call.1} parent=27 // pred_check_branch
          %290 = sbr.rel (%p288) target = $region40
        $region39: #{tpu_custom_call.1} parent=27 // pred_region
          %s292 = ssub.s32 256, 256
          %293 = vsyncadd %s284, %s292
          %s294 = smul.addr %s20, 2
          %s295 = smul.addr %s294, 128
          %s296 = scalar_lea.hbm %s2, %s295
          %s298 = sshll.u32 %s287, 4
          %s299 = int_to_ptr.vmem [resolvable:$true] %s298
          %301 = dma.vmem_to_hbm [thread:$0]  %s299, 256, %s296, %s284
        $region40: #{tpu_custom_call.1} parent=27 // pred_fallthru
          _
      $region28: #{tpu_custom_call.1} parent=5 // pred_fallthru
        _
      %p302 = scmp.le.s32.totalorder 2, %s15
      // Predicated region
      $region41: #{tpu_custom_call.1} parent=5 // pred_check
        %p303 = pneg %p302
      $region42: #{tpu_custom_call.1} parent=5 // pred_check_branch
        %305 = sbr.rel (%p303) target = $region44
      $region43: #{tpu_custom_call.1} parent=5 // pred_region
        %s306 = ssub.s32 %s15, 2
        // Predicated region
        $region45: #{tpu_custom_call.1} parent=43 // pred_check
          %p307 = pneg %p91
        $region46: #{tpu_custom_call.1} parent=43 // pred_check_branch
          %309 = sbr.rel (%p307) target = $region48
        $region47: #{tpu_custom_call.1} parent=43 // pred_region
          %s310 = sand.u32 %s76, 1
          %s311 = scalar_lea.sflag [#allocation4], %s310
          %s312 = sand.u32 %s76, 1
          %s313 = smul.addr %s312, 16
          %s314 = scalar_lea.vmem [#allocation7], %s313
          %315 = dma.done %s311, 256
        $region48: #{tpu_custom_call.1} parent=43 // pred_fallthru
          _
      $region44: #{tpu_custom_call.1} parent=5 // pred_fallthru
        _
    $region6: #{tpu_custom_call.1} parent=1 // loop_footer
      %s19 = sadd.s32 1, %s15
    $region7: #{tpu_custom_call.1} parent=1 // loop_footer_branch
      %14 = sbr.rel target = $region3
    $region8: #{tpu_custom_call.1} parent=1 // loop_exit
      _
    %316 = vsyncpa [#allocation3], 1
    %s317 = scalar_lea.sflag [#allocation3], 1
    %318 = vsyncpa %s317, 1
    %319 = vsyncpa [#allocation4], 1
    %s320 = scalar_lea.sflag [#allocation4], 1
    %321 = vsyncpa %s320, 1
    %322 = vsyncpa [#allocation5], 1
    %s323 = scalar_lea.sflag [#allocation5], 1
    %324 = vsyncpa %s323, 1

</llo_original>
